<compile_context>
chip_gen: v7x
topology: tpu7x:2x2x1
jax: 0.10.0
libtpu: 0.0.40
codegen_flags: <defaults>
</compile_context>

<pallas_src>
import jax
import jax.numpy as jnp
from jax.experimental import pallas as pl
from jax.experimental.pallas import tpu as pltpu

# ----------------------------- module config --------------------------------
VOCAB = 256                         # LabelSmoothing.size (target vocab size)
PADDING_IDX = 0
SMOOTHING = 0.1
CONFIDENCE = 1.0 - SMOOTHING
SMOOTH_VAL = SMOOTHING / (VOCAB - 2)

BATCH = 2
SEQ = 8
N_ROWS = BATCH * SEQ                # 16 rows of flattened log-probs
ROW_BLOCK = 8                       # rows per grid step (sublane-aligned)


# ------------------------------ Pallas kernel --------------------------------
def _label_smoothing_kernel(x_ref, tgt_ref, loss_ref, dist_ref, acc_ref):
    """Fused: build true_dist in-kernel + KLDiv(reduction='sum')."""
    i = pl.program_id(0)

    @pl.when(i == 0)
    def _init():
        acc_ref[...] = jnp.zeros_like(acc_ref)

    x = x_ref[...]                                   # (TN, V) f32 log-probs
    tgt = tgt_ref[...]                               # (TN, 1) int32 target ids
    tn, v = x.shape

    col = jax.lax.broadcasted_iota(jnp.int32, (tn, v), 1)
    is_target = col == tgt                           # scatter_(1, target, conf)
    is_pad_col = col == PADDING_IDX                  # true_dist[:, pad] = 0
    row_is_pad = tgt == PADDING_IDX                  # zero rows with pad target

    td = jnp.where(is_target, CONFIDENCE, SMOOTH_VAL)
    td = jnp.where(is_pad_col, 0.0, td)
    td = jnp.where(row_is_pad, 0.0, td)
    dist_ref[...] = td                               # self.true_dist (lane-dense)

    # KLDivLoss(sum): td * (log(td) - x), with the xlogy convention 0*log(0)=0.
    safe_td = jnp.where(td > 0.0, td, 1.0)           # log() -> EUP slot
    contrib = td * jnp.log(safe_td) - td * x
    acc_ref[...] = acc_ref[...] + jnp.sum(contrib)

    @pl.when(i == pl.num_programs(0) - 1)
    def _finalize():
        loss_ref[...] = acc_ref[...]


# ------------------------------ host wrapper ---------------------------------
def label_smoothing_forward(x, target):
    """x: [N, V] f32 log-probabilities; target: [N] int ids. Returns (loss, true_dist)."""
    n, v = x.shape
    assert v == VOCAB and n % ROW_BLOCK == 0
    tgt2d = target.astype(jnp.int32).reshape(n, 1)

    cost = pl.CostEstimate(
        flops=10 * n * v,                 # compares / selects / mul / sub / sum
        transcendentals=n * v,            # log
        bytes_accessed=4 * (2 * n * v + n + 1),
    )

    loss, true_dist = pl.pallas_call(
        _label_smoothing_kernel,
        out_shape=(
            jax.ShapeDtypeStruct((1, 1), jnp.float32),   # scalar loss
            jax.ShapeDtypeStruct((n, v), jnp.float32),   # true_dist
        ),
        grid=(n // ROW_BLOCK,),
        in_specs=[
            pl.BlockSpec((ROW_BLOCK, v), lambda i: (i, 0)),   # x rows
            pl.BlockSpec((ROW_BLOCK, 1), lambda i: (i, 0)),   # target ids
        ],
        out_specs=(
            pl.BlockSpec((1, 1), lambda i: (0, 0)),           # resident accumulator
            pl.BlockSpec((ROW_BLOCK, v), lambda i: (i, 0)),
        ),
        scratch_shapes=[pltpu.VMEM((1, 1), jnp.float32)],
        compiler_params=pltpu.CompilerParams(
            # grid axis is a reduction into the scalar loss -> "arbitrary"
            # (cannot be megacore-parallel without a cross-core reduction).
            dimension_semantics=("arbitrary",),
        ),
        cost_estimate=cost,
    )(x, tgt2d)
    return loss[0, 0], true_dist


# ----------------------------------- main ------------------------------------
if __name__ == "__main__":
    root = jax.random.PRNGKey(0)
    kx, kt = jax.random.split(root)

    logits = jax.random.normal(kx, (N_ROWS, VOCAB), jnp.float32)
    x = jax.nn.log_softmax(logits, axis=-1)          # KLDivLoss expects log-probs
    target = jax.random.randint(kt, (N_ROWS,), 0, VOCAB, jnp.int32)
    target = target.at[0].set(PADDING_IDX).at[5].set(PADDING_IDX)  # exercise pad rows

    loss, true_dist = label_smoothing_forward(x, target)
    loss = jax.block_until_ready(loss)

    # pure-JAX reference (same op order as torch: scatter_, pad column, pad rows)
    td_ref = jnp.full((N_ROWS, VOCAB), SMOOTH_VAL, jnp.float32)
    td_ref = td_ref.at[jnp.arange(N_ROWS), target].set(CONFIDENCE)
    td_ref = td_ref.at[:, PADDING_IDX].set(0.0)
    td_ref = jnp.where((target == PADDING_IDX)[:, None], 0.0, td_ref)
    safe = jnp.where(td_ref > 0.0, td_ref, 1.0)
    loss_ref = jnp.sum(td_ref * jnp.log(safe) - td_ref * x)

    assert loss.shape == () and loss.dtype == jnp.float32
    assert true_dist.shape == (N_ROWS, VOCAB)
    assert bool(jnp.isfinite(loss))
    assert bool(jnp.allclose(true_dist, td_ref, atol=1e-6))
    assert bool(jnp.allclose(loss, loss_ref, rtol=1e-5, atol=1e-5))
    print("KERNEL_OK")
</pallas_src>

<mosaic_0001>
module attributes {stable_mosaic.version = 11 : i64} {
  func.func @_label_smoothing_kernel(%arg0: i32, %arg1: memref<8x256xf32, #tpu.memory_space<vmem>>, %arg2: memref<8x1xi32, #tpu.memory_space<vmem>>, %arg3: memref<1x1xf32, #tpu.memory_space<vmem>>, %arg4: memref<8x256xf32, #tpu.memory_space<vmem>>, %arg5: memref<1x1xf32, #tpu.memory_space<vmem>>) attributes {dimension_semantics = [#tpu.dimension_semantics<arbitrary>], iteration_bounds = array<i64: 2>, scalar_prefetch = 0 : i64, scratch_operands = 1 : i64, tpu.core_type = #tpu.core_type<tc>, window_params = [{transform_indices = @transform_0, window_bounds = array<i64: 8, 256>}, {transform_indices = @transform_1, window_bounds = array<i64: 8, 1>}, {pipeline_mode = #tpu.pipeline_mode<synchronous>, transform_indices = @transform_2, window_bounds = array<i64: 1, 1>}, {transform_indices = @transform_3, window_bounds = array<i64: 8, 256>}]} {
    %c0_i32 = arith.constant 0 : i32
    %0 = arith.cmpi eq, %arg0, %c0_i32 : i32
    %1 = arith.extui %0 : i1 to i32
    %c0_i32_0 = arith.constant 0 : i32
    %2 = arith.cmpi ne, %1, %c0_i32_0 : i32
    scf.if %2 {
      %cst_19 = arith.constant 0.000000e+00 : f32
      %41 = vector.broadcast %cst_19 : f32 to vector<1x1xf32>
      %c0_20 = arith.constant 0 : index
      %c0_21 = arith.constant 0 : index
      %42 = vector.load %arg5[%c0_20, %c0_21] : memref<1x1xf32, #tpu.memory_space<vmem>>, vector<1x1xf32>
      tpu.vector_store %arg5[%c0_20, %c0_21], %41 {strides = array<i32>} : memref<1x1xf32, #tpu.memory_space<vmem>>, vector<1x1xf32>,
    } else {
    }
    %c0 = arith.constant 0 : index
    %c0_1 = arith.constant 0 : index
    %3 = vector.load %arg1[%c0, %c0_1] : memref<8x256xf32, #tpu.memory_space<vmem>>, vector<8x256xf32>
    %c0_2 = arith.constant 0 : index
    %c0_3 = arith.constant 0 : index
    %4 = vector.load %arg2[%c0_2, %c0_3] : memref<8x1xi32, #tpu.memory_space<vmem>>, vector<8x1xi32>
    %5 = tpu.iota {dimensions = array<i32: 1>} : vector<8x256xi32>
    %6 = vector.broadcast %4 : vector<8x1xi32> to vector<8x256xi32>
    %7 = arith.cmpi eq, %5, %6 : vector<8x256xi32>
    %c0_i32_4 = arith.constant 0 : i32
    %8 = vector.broadcast %c0_i32_4 : i32 to vector<8x256xi32>
    %9 = arith.cmpi eq, %5, %8 : vector<8x256xi32>
    %c0_i32_5 = arith.constant 0 : i32
    %10 = vector.broadcast %c0_i32_5 : i32 to vector<8x1xi32>
    %11 = arith.cmpi eq, %4, %10 : vector<8x1xi32>
    %cst = arith.constant 0.899999976 : f32
    %cst_6 = arith.constant 3.93700786E-4 : f32
    %12 = vector.broadcast %cst : f32 to vector<8x256xf32>
    %13 = vector.broadcast %cst_6 : f32 to vector<8x256xf32>
    %14 = arith.select %7, %12, %13 : vector<8x256xi1>, vector<8x256xf32>
    %cst_7 = arith.constant 0.000000e+00 : f32
    %15 = vector.broadcast %cst_7 : f32 to vector<8x256xf32>
    %16 = arith.select %9, %15, %14 : vector<8x256xi1>, vector<8x256xf32>
    %cst_8 = arith.constant 0.000000e+00 : f32
    %17 = vector.shape_cast %11 : vector<8x1xi1> to vector<8x1xi1>
    %18 = vector.broadcast %17 : vector<8x1xi1> to vector<8x256xi1>
    %19 = vector.broadcast %cst_8 : f32 to vector<8x256xf32>
    %20 = arith.select %18, %19, %16 : vector<8x256xi1>, vector<8x256xf32>
    %c0_9 = arith.constant 0 : index
    %c0_10 = arith.constant 0 : index
    %21 = vector.load %arg4[%c0_9, %c0_10] : memref<8x256xf32, #tpu.memory_space<vmem>>, vector<8x256xf32>
    tpu.vector_store %arg4[%c0_9, %c0_10], %20 {strides = array<i32>} : memref<8x256xf32, #tpu.memory_space<vmem>>, vector<8x256xf32>,
    %cst_11 = arith.constant 0.000000e+00 : f32
    %22 = vector.broadcast %cst_11 : f32 to vector<8x256xf32>
    %23 = arith.cmpf ogt, %20, %22 : vector<8x256xf32>
    %cst_12 = arith.constant 1.000000e+00 : f32
    %24 = vector.broadcast %cst_12 : f32 to vector<8x256xf32>
    %25 = arith.select %23, %20, %24 : vector<8x256xi1>, vector<8x256xf32>
    %26 = math.log %25 : vector<8x256xf32>
    %27 = arith.mulf %20, %26 : vector<8x256xf32>
    %28 = arith.mulf %20, %3 : vector<8x256xf32>
    %29 = arith.subf %27, %28 : vector<8x256xf32>
    %c0_13 = arith.constant 0 : index
    %c0_14 = arith.constant 0 : index
    %30 = vector.load %arg5[%c0_13, %c0_14] : memref<1x1xf32, #tpu.memory_space<vmem>>, vector<1x1xf32>
    %31 = vector.shape_cast %29 : vector<8x256xf32> to vector<1x8x256xf32>
    %cst_15 = arith.constant dense<0.000000e+00> : vector<1xf32>
    %32 = vector.multi_reduction <add>, %31, %cst_15 [1, 2] : vector<1x8x256xf32> to vector<1xf32>
    %33 = vector.shape_cast %32 : vector<1xf32> to vector<1x1x1xf32>
    %34 = vector.extract %33[0, 0, 0] : f32 from vector<1x1x1xf32>
    %35 = vector.broadcast %34 : f32 to vector<1x1xf32>
    %36 = arith.addf %30, %35 : vector<1x1xf32>
    %c0_16 = arith.constant 0 : index
    %c0_17 = arith.constant 0 : index
    %37 = vector.load %arg5[%c0_16, %c0_17] : memref<1x1xf32, #tpu.memory_space<vmem>>, vector<1x1xf32>
    tpu.vector_store %arg5[%c0_16, %c0_17], %36 {strides = array<i32>} : memref<1x1xf32, #tpu.memory_space<vmem>>, vector<1x1xf32>,
    %c1_i32 = arith.constant 1 : i32
    %38 = arith.cmpi eq, %arg0, %c1_i32 : i32
    %39 = arith.extui %38 : i1 to i32
    %c0_i32_18 = arith.constant 0 : i32
    %40 = arith.cmpi ne, %39, %c0_i32_18 : i32
    scf.if %40 {
      %c0_19 = arith.constant 0 : index
      %c0_20 = arith.constant 0 : index
      %41 = vector.load %arg5[%c0_19, %c0_20] : memref<1x1xf32, #tpu.memory_space<vmem>>, vector<1x1xf32>
      %c0_21 = arith.constant 0 : index
      %c0_22 = arith.constant 0 : index
      %42 = vector.load %arg3[%c0_21, %c0_22] : memref<1x1xf32, #tpu.memory_space<vmem>>, vector<1x1xf32>
      tpu.vector_store %arg3[%c0_21, %c0_22], %41 {strides = array<i32>} : memref<1x1xf32, #tpu.memory_space<vmem>>, vector<1x1xf32>,
    } else {
    }
    return
  }
  func.func @transform_0(%arg0: i32) -> (i32, i32) {
    %c0_i32 = arith.constant 0 : i32
    %c0_i32_0 = arith.constant 0 : i32
    return %arg0, %c0_i32 : i32, i32
  }
  func.func @transform_1(%arg0: i32) -> (i32, i32) {
    %c0_i32 = arith.constant 0 : i32
    %c0_i32_0 = arith.constant 0 : i32
    return %arg0, %c0_i32 : i32, i32
  }
  func.func @transform_2(%arg0: i32) -> (i32, i32) {
    %c0_i32 = arith.constant 0 : i32
    %c0_i32_0 = arith.constant 0 : i32
    %c0_i32_1 = arith.constant 0 : i32
    return %c0_i32, %c0_i32_0 : i32, i32
  }
  func.func @transform_3(%arg0: i32) -> (i32, i32) {
    %c0_i32 = arith.constant 0 : i32
    %c0_i32_0 = arith.constant 0 : i32
    return %arg0, %c0_i32 : i32, i32
  }
}

</mosaic_0001>

<llo_original>
// kernel: tpu_custom_call.1
$region0: #{tpu_custom_call.1}
  #allocation0 [shape = 'u32[]', space=smem, size = 0x4, offset = 0x4, fixed_abs, tag = 'smem constant byte address 0x4 - core index']
  #allocation1 [shape = 'u32[144,128]{1,0:T(1,128)}', space=vmem, size = 0x12000, scoped, tag = 'internal scratch']
  #allocation2 [shape = 'f32[1,1]{1,0:T(1,128)}', space=vmem, size = 0x200, scoped, tag = 'scratch operand']
  %s0 = inlined_call_operand.hbm [shape: f32[16,256], index: 0, kind: input, shape index: {}]
  %s1 = inlined_call_operand.vmem [shape: s32[16,1], index: 1, kind: input, shape index: {}]
  %s2 = inlined_call_operand.hbm [shape: f32[1,1], index: 2, kind: output, shape index: {0}]
  %s3 = inlined_call_operand.hbm [shape: f32[16,256], index: 3, kind: output, shape index: {1}]
  %4 = xla_tuple %s2, %s3
  %s5 = sld [smem:[#allocation0]]
  $region61: #{tpu_custom_call.1} parent=0
    _
  %s7 = ssub.s32 1, %s5
  %s8 = scalar_select 0, %s7, %s5
  $region1: #{tpu_custom_call.1} parent=0
    #allocation3 [shape = 'u8[16384]{0}', space=vmem, size = 0x4000, scoped, tag = 'input window, operand 0']
    #allocation4 [shape = 's32[2]{0}', space=sflag, size = 0x8, scoped, tag = 'scoped memory for tpu_custom_call.1']
    #allocation5 [shape = 's32[2]{0}', space=sflag, size = 0x8, scoped, tag = 'scoped memory for tpu_custom_call.1']
    #allocation6 [shape = 'u8[512]{0}', space=vmem, size = 0x400, scoped, tag = 'output window, operand 0, single buffered']
    #allocation7 [shape = 'u8[16384]{0}', space=vmem, size = 0x4000, scoped, tag = 'output window, operand 1']
    #allocation8 [shape = 's32[2]{0}', space=sflag, size = 0x8, scoped, tag = 'scoped memory for tpu_custom_call.1']
    %9 = vsyncpa [#allocation4], 0
    %s10 = scalar_lea.sflag [#allocation4], 1
    %11 = vsyncpa %s10, 0
    %12 = vsyncpa [#allocation5], 0
    %13 = vsyncpa [#allocation8], 0
    %s14 = scalar_lea.sflag [#allocation8], 1
    %15 = vsyncpa %s14, 0
    loop: start=0, step=1, limit=4
    $region2: #{tpu_custom_call.1} parent=1 // loop_pre_header
      _
    $region3: #{tpu_custom_call.1} parent=1 // loop_header
      %s17 = sphi 0, %s21
      %p18 = scmp.ge.s32.totalorder %s17, 4
      %s27 = sphi 0, %s29
      %s30 = sphi 0, %s27
      %s31 = sphi 0, %s30
      %s47 = sphi 0, %s31
      %s53 = sphi 0, %s55
      %s56 = sphi 0, %s53
      %s57 = sphi 0, %s56
      %s73 = sphi 0, %s57
      %s77 = sphi 0, %s77
      %s79 = sphi 0, %s77
      %s80 = sphi 0, %s79
      %s94 = sphi 0, %s80
      %s100 = sphi 0, %s102
      %s103 = sphi 0, %s100
      %s104 = sphi 0, %s103
      %s120 = sphi 0, %s104
    $region4: #{tpu_custom_call.1} parent=1 // loop_header_branch
      %20 = sbr.rel (%p18) target = $region8
    $region5: #{tpu_custom_call.1} parent=1 // loop_body
      %s22 = ssub.s32 %s17, 1
      %s23 = ssub.s32 %s17, 2
      %s24 = sadd.s32 %s17, 1
      %s25 = ssub.s32 %s17, %s24
      %p26 = scmp.eq.s32.totalorder %s25, 0
      %s28 = sadd.s32 %s27, 1
      %s29 = scalar_select %p26, %s27, %s28
      %p32 = pneg %p26
      %p33 = scmp.eq.s32.totalorder %s17, 1
      %p34 = por %p32, %p33
      %p35 = scmp.ne.s32.totalorder %s27, %s30
      %p36 = scmp.eq.s32.totalorder %s17, 0
      %p37 = por %p35, %p36
      %p38 = scmp.ne.s32.totalorder %s27, %s30
      %p39 = scmp.eq.s32.totalorder %s22, 1
      %p40 = por %p38, %p39
      %p41 = scmp.ne.s32.totalorder %s30, %s31
      %p42 = scmp.eq.s32.totalorder %s22, 0
      %p43 = por %p41, %p42
      %p44 = scmp.ne.s32.totalorder %s30, %s31
      %p45 = scmp.eq.s32.totalorder %s23, 1
      %p46 = por %p44, %p45
      %p48 = scmp.ne.s32.totalorder %s31, %s47
      %p49 = scmp.eq.s32.totalorder %s23, 0
      %p50 = por %p48, %p49
      %s51 = ssub.s32 %s17, %s24
      %p52 = scmp.eq.s32.totalorder %s51, 0
      %s54 = sadd.s32 %s53, 1
      %s55 = scalar_select %p52, %s53, %s54
      %p58 = pneg %p52
      %p59 = scmp.eq.s32.totalorder %s17, 1
      %p60 = por %p58, %p59
      %p61 = scmp.ne.s32.totalorder %s53, %s56
      %p62 = scmp.eq.s32.totalorder %s17, 0
      %p63 = por %p61, %p62
      %p64 = scmp.ne.s32.totalorder %s53, %s56
      %p65 = scmp.eq.s32.totalorder %s22, 1
      %p66 = por %p64, %p65
      %p67 = scmp.ne.s32.totalorder %s56, %s57
      %p68 = scmp.eq.s32.totalorder %s22, 0
      %p69 = por %p67, %p68
      %p70 = scmp.ne.s32.totalorder %s56, %s57
      %p71 = scmp.eq.s32.totalorder %s23, 1
      %p72 = por %p70, %p71
      %p74 = scmp.ne.s32.totalorder %s57, %s73
      %p75 = scmp.eq.s32.totalorder %s23, 0
      %p76 = por %p74, %p75
      %s78 = sadd.s32 %s77, 1
      %p81 = scmp.eq.s32.totalorder %s17, 1
      %p82 = scmp.ne.s32.totalorder %s77, %s79
      %p83 = scmp.eq.s32.totalorder %s17, 0
      %p84 = por %p82, %p83
      %p85 = scmp.ne.s32.totalorder %s77, %s79
      %p86 = scmp.eq.s32.totalorder %s22, 1
      %p87 = por %p85, %p86
      %p88 = scmp.ne.s32.totalorder %s79, %s80
      %p89 = scmp.eq.s32.totalorder %s22, 0
      %p90 = por %p88, %p89
      %p91 = scmp.ne.s32.totalorder %s79, %s80
      %p92 = scmp.eq.s32.totalorder %s23, 1
      %p93 = por %p91, %p92
      %p95 = scmp.ne.s32.totalorder %s80, %s94
      %p96 = scmp.eq.s32.totalorder %s23, 0
      %p97 = por %p95, %p96
      %s98 = ssub.s32 %s17, %s24
      %p99 = scmp.eq.s32.totalorder %s98, 0
      %s101 = sadd.s32 %s100, 1
      %s102 = scalar_select %p99, %s100, %s101
      %p105 = pneg %p99
      %p106 = scmp.eq.s32.totalorder %s17, 1
      %p107 = por %p105, %p106
      %p108 = scmp.ne.s32.totalorder %s100, %s103
      %p109 = scmp.eq.s32.totalorder %s17, 0
      %p110 = por %p108, %p109
      %p111 = scmp.ne.s32.totalorder %s100, %s103
      %p112 = scmp.eq.s32.totalorder %s22, 1
      %p113 = por %p111, %p112
      %p114 = scmp.ne.s32.totalorder %s103, %s104
      %p115 = scmp.eq.s32.totalorder %s22, 0
      %p116 = por %p114, %p115
      %p117 = scmp.ne.s32.totalorder %s103, %s104
      %p118 = scmp.eq.s32.totalorder %s23, 1
      %p119 = por %p117, %p118
      %p121 = scmp.ne.s32.totalorder %s104, %s120
      %p122 = scmp.eq.s32.totalorder %s23, 0
      %p123 = por %p121, %p122
      %p124 = scmp.le.s32.totalorder 1, %s17
      %p125 = scmp.lt.s32.totalorder %s17, 3
      %p126 = pnand %p124, %p125
      %p127 = pneg %p126
      // Predicated region
      $region9: #{tpu_custom_call.1} parent=5 // pred_check
        _
      $region10: #{tpu_custom_call.1} parent=5 // pred_check_branch
        %129 = sbr.rel (%p126) target = $region12
      $region11: #{tpu_custom_call.1} parent=5 // pred_region
        %s130 = ssub.s32 %s17, 1
      $region12: #{tpu_custom_call.1} parent=5 // pred_fallthru
        _
      %p131 = scmp.lt.s32.totalorder %s17, 2
      // Predicated region
      $region13: #{tpu_custom_call.1} parent=5 // pred_check
        %p132 = pneg %p131
      $region14: #{tpu_custom_call.1} parent=5 // pred_check_branch
        %134 = sbr.rel (%p132) target = $region16
      $region15: #{tpu_custom_call.1} parent=5 // pred_region
        // Predicated region
        $region17: #{tpu_custom_call.1} parent=15 // pred_check
          %p135 = pneg %p37
        $region18: #{tpu_custom_call.1} parent=15 // pred_check_branch
          %137 = sbr.rel (%p135) target = $region20
        $region19: #{tpu_custom_call.1} parent=15 // pred_region
          %s138 = sand.u32 %s27, 1
          %s139 = scalar_lea.sflag [#allocation4], %s138
          %s140 = sand.u32 %s27, 1
          %s141 = smul.addr %s140, 16
          %s142 = scalar_lea.vmem [#allocation3], %s141
          %s144 = ssub.s32 256, 256
          %145 = vsyncadd %s139, %s144
          %s146 = smul.addr %s17, 2
          %s147 = smul.addr %s146, 128
          %s148 = scalar_lea.hbm %s0, %s147
          %s150 = sshll.u32 %s142, 4
          %s151 = int_to_ptr.vmem [resolvable:$true] %s150
          %153 = dma.hbm_to_vmem [thread:$0]  %s148, 256, %s151, %s139
        $region20: #{tpu_custom_call.1} parent=15 // pred_fallthru
          _
        // Predicated region
        $region21: #{tpu_custom_call.1} parent=15 // pred_check
          %p154 = pneg %p63
        $region22: #{tpu_custom_call.1} parent=15 // pred_check_branch
          %156 = sbr.rel (%p154) target = $region24
        $region23: #{tpu_custom_call.1} parent=15 // pred_region
          %p157 = scmp.lt.s32.totalorder %s17, 1
          %s158 = scalar_select %p157, %s17, 1
          %s159 = smul.addr %s158, 8
          %s160 = scalar_lea.vmem %s1, %s159
        $region24: #{tpu_custom_call.1} parent=15 // pred_fallthru
          _
      $region16: #{tpu_custom_call.1} parent=5 // pred_fallthru
        _
      %p161 = scmp.le.s32.totalorder 1, %s17
      %p162 = scmp.lt.s32.totalorder %s17, 3
      %p163 = pnand %p161, %p162
      %p164 = pneg %p163
      // Predicated region
      $region25: #{tpu_custom_call.1} parent=5 // pred_check
        _
      $region26: #{tpu_custom_call.1} parent=5 // pred_check_branch
        %166 = sbr.rel (%p163) target = $region28
      $region27: #{tpu_custom_call.1} parent=5 // pred_region
        %s167 = ssub.s32 %s17, 1
        %s168 = sand.u32 %s30, 1
        %s169 = scalar_lea.sflag [#allocation4], %s168
        %s170 = sand.u32 %s30, 1
        %s171 = smul.addr %s170, 16
        %s172 = scalar_lea.vmem [#allocation3], %s171
        // Predicated region
        $region29: #{tpu_custom_call.1} parent=27 // pred_check
          %p173 = pneg %p43
        $region30: #{tpu_custom_call.1} parent=27 // pred_check_branch
          %175 = sbr.rel (%p173) target = $region32
        $region31: #{tpu_custom_call.1} parent=27 // pred_region
          %176 = dma.done %s169, 256
        $region32: #{tpu_custom_call.1} parent=27 // pred_fallthru
          _
        %s177 = sand.u32 %s30, 1
        %s178 = scalar_lea.sflag [#allocation4], %s177
        %s179 = sand.u32 %s30, 1
        %s180 = smul.addr %s179, 16
        %s181 = scalar_lea.vmem [#allocation3], %s180
        %p182 = pneg %p43
        %p183 = pneg %p40
        %p184 = scmp.lt.s32.totalorder %s22, 1
        %s185 = scalar_select %p184, %s22, 1
        %s186 = smul.addr %s185, 8
        %s187 = scalar_lea.vmem %s1, %s186
        %p188 = pneg %p69
        %p189 = pneg %p66
        %p190 = pneg %p90
        %p191 = pneg %p87
        %p192 = pneg %p116
        %p193 = pneg %p113
        %s194 = sand.u32 %s103, 1
        %s195 = scalar_lea.sflag [#allocation8], %s194
        %s196 = sand.u32 %s103, 1
        %s197 = smul.addr %s196, 16
        %s198 = scalar_lea.vmem [#allocation7], %s197
        %p199 = scmp.lt.s32.totalorder %s22, 1
        %s200 = scalar_select %p199, %s22, 1
        %s201 = smul.addr %s200, 8
        %s202 = scalar_lea.vmem %s1, %s201
        %p203 = scmp.eq.s32.totalorder %s22, 0
        // Predicated region
        $region33: #{tpu_custom_call.1} parent=27 // pred_check
          %p204 = pneg %p203
        $region34: #{tpu_custom_call.1} parent=27 // pred_check_branch
          %206 = sbr.rel (%p204) target = $region36
        $region35: #{tpu_custom_call.1} parent=27 // pred_region
          %vm207 = vcmask 0
          %208 = vst.msk [vmem:[#allocation2] sm:$0x1] %vm207, 0.0
        $region36: #{tpu_custom_call.1} parent=27 // pred_fallthru
          _
        %v209 = vld [vmem:[%s172] sm:$0xff]
        %v210 = vld [vmem:[%s172 + $0x8] sm:$0xff]
        %v211 = vld [vmem:[%s202] sm:$0xff]
        %v212 = vlaneseq
        %v213 = vand.u32 %v212, 127
        %v214 = vadd.s32 %v213, 128
        %215 = vset.pattern.permute.xlu0 0
        %216 = vperm.xlu0 %215, %v211
        %v217 = vpop.permute.xlu0 %216
        %vm218 = vcmp.eq.s32.totalorder %v213, %v217
        %vm219 = vcmp.eq.s32.totalorder %v214, %v217
        %vm220 = vcmp.eq.s32.totalorder %v213, 0
        %vm221 = vcmp.eq.s32.totalorder %v214, 0
        %vm222 = vcmp.eq.s32.totalorder %v211, 0
        %v223 = vsel %vm218, 0.9, 0.0003937008
        %v224 = vsel %vm219, 0.9, 0.0003937008
        %v225 = vsel %vm220, 0.0, %v223
        %v226 = vsel %vm221, 0.0, %v224
        %v227 = vsel %vm222, 1, 0
        %228 = vset.pattern.permute.xlu0 0
        %229 = vperm.xlu0 %228, %v227
        %v230 = vpop.permute.xlu0 %229
        %vm231 = vcmp.eq.s32.totalorder %v230, 1
        %v232 = vsel %vm231, 0.0, %v225
        %v233 = vsel %vm231, 0.0, %v226
        %234 = vst [vmem:[%s198] sm:$0xff] %v232
        %235 = vst [vmem:[%s198 + $0x8] sm:$0xff] %v233
        %vm236 = vcmp.gt.f32.partialorder %v232, 0.0
        %vm237 = vcmp.gt.f32.partialorder %v233, 0.0
        %v238 = vsel %vm236, %v232, 1.0
        %v239 = vsel %vm237, %v233, 1.0
        %v240 = vlog2.pop %v238
        %v241 = vmul.f32 %v240, 0.6931472
        %v242 = vlog2.pop %v239
        %v243 = vmul.f32 %v242, 0.6931472
        %v244 = vmul.f32 %v232, %v241
        %v245 = vmul.f32 %v233, %v243
        %v246 = vmul.f32 %v232, %v209
        %v247 = vmul.f32 %v233, %v210
        %v248 = vsub.f32 %v244, %v246
        %v249 = vsub.f32 %v245, %v247
        %v250 = vld [vmem:[#allocation2] sm:$0x1]
        %v251 = vadd.f32 %v248, %v249
        %252 = vadd.xlane.f32.xlu0 %v251
        %v253 = vpop.xlane.xlu0 %252
        %v254 = vrot.slane %v253, 4
        %v255 = vadd.f32 %v253, %v254
        %v256 = vrot.slane %v255, 2
        %v257 = vadd.f32 %v255, %v256
        %v258 = vrot.slane %v257, 1
        %v259 = vadd.f32 %v257, %v258
        %s260 = vtos %v259
        %v261 = vstv %s260
        %v262 = vadd.f32 %v250, %v261
        %vm263 = vcmask 0
        %264 = vst.msk [vmem:[#allocation2] sm:$0x1] %vm263, %v262
        %p265 = scmp.eq.s32.totalorder %s22, 1
        // Predicated region
        $region37: #{tpu_custom_call.1} parent=27 // pred_check
          %p266 = pneg %p265
        $region38: #{tpu_custom_call.1} parent=27 // pred_check_branch
          %268 = sbr.rel (%p266) target = $region40
        $region39: #{tpu_custom_call.1} parent=27 // pred_region
          %v269 = vld [vmem:[#allocation2] sm:$0x1]
          %270 = vst.msk [vmem:[#allocation6] sm:$0x1] %vm263, %v269
        $region40: #{tpu_custom_call.1} parent=27 // pred_fallthru
          _
        %s271 = sand.u32 %s103, 1
        %s272 = scalar_lea.sflag [#allocation8], %s271
        %s273 = sand.u32 %s103, 1
        %s274 = smul.addr %s273, 16
        %s275 = scalar_lea.vmem [#allocation7], %s274
        // Predicated region
        $region41: #{tpu_custom_call.1} parent=27 // pred_check
          %p276 = pneg %p87
        $region42: #{tpu_custom_call.1} parent=27 // pred_check_branch
          %278 = sbr.rel (%p276) target = $region44
        $region43: #{tpu_custom_call.1} parent=27 // pred_region
          %s280 = ssub.s32 16, 16
          %281 = vsyncadd [#allocation5], %s280
          %s283 = sshll.u32 [#allocation6], 4
          %s284 = int_to_ptr.vmem [resolvable:$true] %s283
          %286 = dma.vmem_to_hbm [thread:$0]  %s284, 16, %s2, [#allocation5]
        $region44: #{tpu_custom_call.1} parent=27 // pred_fallthru
          _
        // Predicated region
        $region45: #{tpu_custom_call.1} parent=27 // pred_check
          %p287 = pneg %p113
        $region46: #{tpu_custom_call.1} parent=27 // pred_check_branch
          %289 = sbr.rel (%p287) target = $region48
        $region47: #{tpu_custom_call.1} parent=27 // pred_region
          %s291 = ssub.s32 256, 256
          %292 = vsyncadd %s272, %s291
          %s293 = smul.addr %s22, 2
          %s294 = smul.addr %s293, 128
          %s295 = scalar_lea.hbm %s3, %s294
          %s297 = sshll.u32 %s275, 4
          %s298 = int_to_ptr.vmem [resolvable:$true] %s297
          %300 = dma.vmem_to_hbm [thread:$0]  %s298, 256, %s295, %s272
        $region48: #{tpu_custom_call.1} parent=27 // pred_fallthru
          _
        // Predicated region
        $region49: #{tpu_custom_call.1} parent=27 // pred_check
          %p301 = pneg %p87
        $region50: #{tpu_custom_call.1} parent=27 // pred_check_branch
          %303 = sbr.rel (%p301) target = $region52
        $region51: #{tpu_custom_call.1} parent=27 // pred_region
          %304 = dma.done [#allocation5], 16
        $region52: #{tpu_custom_call.1} parent=27 // pred_fallthru
          _
      $region28: #{tpu_custom_call.1} parent=5 // pred_fallthru
        _
      %p305 = scmp.le.s32.totalorder 2, %s17
      // Predicated region
      $region53: #{tpu_custom_call.1} parent=5 // pred_check
        %p306 = pneg %p305
      $region54: #{tpu_custom_call.1} parent=5 // pred_check_branch
        %308 = sbr.rel (%p306) target = $region56
      $region55: #{tpu_custom_call.1} parent=5 // pred_region
        %s309 = ssub.s32 %s17, 2
        // Predicated region
        $region57: #{tpu_custom_call.1} parent=55 // pred_check
          %p310 = pneg %p119
        $region58: #{tpu_custom_call.1} parent=55 // pred_check_branch
          %312 = sbr.rel (%p310) target = $region60
        $region59: #{tpu_custom_call.1} parent=55 // pred_region
          %s313 = sand.u32 %s104, 1
          %s314 = scalar_lea.sflag [#allocation8], %s313
          %s315 = sand.u32 %s104, 1
          %s316 = smul.addr %s315, 16
          %s317 = scalar_lea.vmem [#allocation7], %s316
          %318 = dma.done %s314, 256
        $region60: #{tpu_custom_call.1} parent=55 // pred_fallthru
          _
      $region56: #{tpu_custom_call.1} parent=5 // pred_fallthru
        _
    $region6: #{tpu_custom_call.1} parent=1 // loop_footer
      %s21 = sadd.s32 1, %s17
    $region7: #{tpu_custom_call.1} parent=1 // loop_footer_branch
      %16 = sbr.rel target = $region3
    $region8: #{tpu_custom_call.1} parent=1 // loop_exit
      _
    %319 = vsyncpa [#allocation4], 1
    %s320 = scalar_lea.sflag [#allocation4], 1
    %321 = vsyncpa %s320, 1
    %322 = vsyncpa [#allocation5], 1
    %s323 = scalar_lea.sflag [#allocation5], 1
    %324 = vsyncpa %s323, 1
    %325 = vsyncpa [#allocation8], 1
    %s326 = scalar_lea.sflag [#allocation8], 1
    %327 = vsyncpa %s326, 1

</llo_original>
